<compile_context>
chip_gen: v6e
topology: v6e:2x2x1
jax: 0.10.0
libtpu: 0.0.40
codegen_flags: <defaults>
</compile_context>

<pallas_src>
import jax
import jax.numpy as jnp
from jax.experimental import pallas as pl
from jax.experimental.pallas import tpu as pltpu

LANE = 128


def _round_up(x, m):
    return ((x + m - 1) // m) * m


def bias_svd_kernel(p_ref, q_ref, bias_ref, o_ref):
    # p_ref, q_ref: (k, tb) bf16   bias_ref, o_ref: (1, tb) f32
    k = p_ref.shape[0]
    acc = bias_ref[...]                                      # (1, tb) f32
    for s in range(0, k, 8):                                 # static, unrolled
        c = min(8, k - s)
        p = p_ref[s:s + c, :].astype(jnp.float32)
        q = q_ref[s:s + c, :].astype(jnp.float32)
        acc = acc + jnp.sum(p * q, axis=0, keepdims=True)    # sublane reduce
    o_ref[...] = acc


def bias_svd_forward(P, Q, bu_w, bi_w, mu, u, i, *, tb=32768):
    """Full BiasSVD forward. Gather is JAX glue; multiply/reduce/bias in Pallas."""
    B = u.shape[0]
    k = P.shape[1]

    # --- bf16 tables so the gather reads half the bytes; in practice the
    #     params would be stored as bf16 (cast hoisted out of the batch loop).
    p = jnp.take(P.astype(jnp.bfloat16), u, axis=0)          # (B, k) bf16
    q = jnp.take(Q.astype(jnp.bfloat16), i, axis=0)          # (B, k) bf16
    bias = (jnp.take(bu_w[:, 0], u, axis=0)
            + jnp.take(bi_w[:, 0], i, axis=0)
            + mu[0]).astype(jnp.float32).reshape(1, B)       # (1, B) f32

    # --- lane-major presentation: k on sublanes, batch on lanes (transpose is
    #     left to XLA / allow_input_fusion rather than padded+materialized).
    p_t = p.T                                                # (k, B)
    q_t = q.T                                                # (k, B)

    # --- tile sizing: multiple of 128, large to amortize per-step overhead,
    #     capped so grid >= 2 whenever B allows (v7x megacore).
    tb = max(LANE, (int(tb) // LANE) * LANE)
    if B > LANE:
        tb = min(tb, _round_up((B + 1) // 2, LANE))
    else:
        tb = LANE
    grid = (pl.cdiv(B, tb),)

    out = pl.pallas_call(
        bias_svd_kernel,
        out_shape=jax.ShapeDtypeStruct((1, B), jnp.float32),
        grid_spec=pltpu.PrefetchScalarGridSpec(
            num_scalar_prefetch=0,
            grid=grid,
            in_specs=[
                pl.BlockSpec((k, tb), lambda b: (0, b)),     # P(u)^T  (bf16)
                pl.BlockSpec((k, tb), lambda b: (0, b)),     # Q(i)^T  (bf16)
                pl.BlockSpec((1, tb), lambda b: (0, b)),     # bu+bi+mu (f32)
            ],
            out_specs=pl.BlockSpec((1, tb), lambda b: (0, b)),
        ),
        compiler_params=pltpu.CompilerParams(
            dimension_semantics=("parallel",),
            allow_input_fusion=[True, True, True],
            vmem_limit_bytes=32 * 1024 * 1024,
        ),
    )(p_t, q_t, bias)
    return out[0]                                            # (B,) == .squeeze()


if __name__ == "__main__":
    # Small, deterministic setup consistent with BiasSVD.__init__
    n_users, n_items, k = 16, 24, 32

    key = jax.random.PRNGKey(0)
    k1, k2, k3, k4, k5, k6, k7, k8 = jax.random.split(key, 8)

    # nn.init.normal_(emb.weight, 0, 0.05) equivalents
    P = 0.05 * jax.random.normal(k1, (n_users, k), jnp.float32)
    Q = 0.05 * jax.random.normal(k2, (n_items, k), jnp.float32)
    bu_w = 0.05 * jax.random.normal(k3, (n_users, 1), jnp.float32)
    bi_w = 0.05 * jax.random.normal(k4, (n_items, 1), jnp.float32)
    mu = jnp.zeros((1,), jnp.float32)  # nn.Parameter(torch.zeros(1))

    fwd = jax.jit(bias_svd_forward, static_argnames=("tb",))

    def check(u, i):
        out = jax.block_until_ready(fwd(P, Q, bu_w, bi_w, mu, u, i))
        assert out.shape == u.shape, out.shape
        # Reference 1: same math as the kernel (bf16 factors, f32 accumulate).
        P_b = P.astype(jnp.bfloat16).astype(jnp.float32)
        Q_b = Q.astype(jnp.bfloat16).astype(jnp.float32)
        ref_bf16 = (jnp.sum(P_b[u] * Q_b[i], axis=1)
                    + bu_w[u, 0] + bi_w[i, 0] + mu[0])
        assert jnp.allclose(out, ref_bf16, atol=1e-5), (out, ref_bf16)
        # Reference 2: full-f32 torch semantics (loose tol for bf16 factor cast).
        ref_f32 = jnp.sum(P[u] * Q[i], axis=1) + bu_w[u, 0] + bi_w[i, 0] + mu[0]
        assert jnp.allclose(out, ref_f32, atol=5e-3), (out, ref_f32)

    # batch 1: tiny batch, single (masked) block
    B = 8
    check(jax.random.randint(k5, (B,), 0, n_users, dtype=jnp.int32),
          jax.random.randint(k6, (B,), 0, n_items, dtype=jnp.int32))

    # batch 2: exercises grid >= 2 and a ragged last block (no padding path)
    B2 = 300
    check(jax.random.randint(k7, (B2,), 0, n_users, dtype=jnp.int32),
          jax.random.randint(k8, (B2,), 0, n_items, dtype=jnp.int32))

    print("KERNEL_OK")
</pallas_src>

<mosaic_0001>
module attributes {stable_mosaic.version = 11 : i64} {
  func.func @bias_svd_kernel(%arg0: i32, %arg1: memref<32x128xbf16, #tpu.memory_space<vmem>>, %arg2: memref<32x128xbf16, #tpu.memory_space<vmem>>, %arg3: memref<1x128xf32, #tpu.memory_space<vmem>>, %arg4: memref<1x128xf32, #tpu.memory_space<vmem>>) attributes {dimension_semantics = [#tpu.dimension_semantics<parallel>], iteration_bounds = array<i64: 1>, scalar_prefetch = 0 : i64, scratch_operands = 0 : i64, tpu.core_type = #tpu.core_type<tc>, window_params = [{transform_indices = @transform_0, window_bounds = array<i64: 32, 128>}, {transform_indices = @transform_1, window_bounds = array<i64: 32, 128>}, {transform_indices = @transform_2, window_bounds = array<i64: 1, 128>}, {transform_indices = @transform_3, window_bounds = array<i64: 1, 128>}]} {
    %c0 = arith.constant 0 : index
    %c0_0 = arith.constant 0 : index
    %0 = vector.load %arg3[%c0, %c0_0] : memref<1x128xf32, #tpu.memory_space<vmem>>, vector<1x128xf32>
    %c0_1 = arith.constant 0 : index
    %c0_2 = arith.constant 0 : index
    %1 = vector.load %arg1[%c0_1, %c0_2] : memref<32x128xbf16, #tpu.memory_space<vmem>>, vector<8x128xbf16>
    %2 = arith.extf %1 : vector<8x128xbf16> to vector<8x128xf32>
    %c0_3 = arith.constant 0 : index
    %c0_4 = arith.constant 0 : index
    %3 = vector.load %arg2[%c0_3, %c0_4] : memref<32x128xbf16, #tpu.memory_space<vmem>>, vector<8x128xbf16>
    %4 = arith.extf %3 : vector<8x128xbf16> to vector<8x128xf32>
    %5 = arith.mulf %2, %4 : vector<8x128xf32>
    %cst = arith.constant dense<0.000000e+00> : vector<128xf32>
    %6 = vector.multi_reduction <add>, %5, %cst [0] : vector<8x128xf32> to vector<128xf32>
    %7 = vector.shape_cast %6 : vector<128xf32> to vector<1x128xf32>
    %8 = arith.addf %0, %7 : vector<1x128xf32>
    %c8 = arith.constant 8 : index
    %c0_5 = arith.constant 0 : index
    %9 = vector.load %arg1[%c8, %c0_5] : memref<32x128xbf16, #tpu.memory_space<vmem>>, vector<8x128xbf16>
    %10 = arith.extf %9 : vector<8x128xbf16> to vector<8x128xf32>
    %c8_6 = arith.constant 8 : index
    %c0_7 = arith.constant 0 : index
    %11 = vector.load %arg2[%c8_6, %c0_7] : memref<32x128xbf16, #tpu.memory_space<vmem>>, vector<8x128xbf16>
    %12 = arith.extf %11 : vector<8x128xbf16> to vector<8x128xf32>
    %13 = arith.mulf %10, %12 : vector<8x128xf32>
    %cst_8 = arith.constant dense<0.000000e+00> : vector<128xf32>
    %14 = vector.multi_reduction <add>, %13, %cst_8 [0] : vector<8x128xf32> to vector<128xf32>
    %15 = vector.shape_cast %14 : vector<128xf32> to vector<1x128xf32>
    %16 = arith.addf %8, %15 : vector<1x128xf32>
    %c16 = arith.constant 16 : index
    %c0_9 = arith.constant 0 : index
    %17 = vector.load %arg1[%c16, %c0_9] : memref<32x128xbf16, #tpu.memory_space<vmem>>, vector<8x128xbf16>
    %18 = arith.extf %17 : vector<8x128xbf16> to vector<8x128xf32>
    %c16_10 = arith.constant 16 : index
    %c0_11 = arith.constant 0 : index
    %19 = vector.load %arg2[%c16_10, %c0_11] : memref<32x128xbf16, #tpu.memory_space<vmem>>, vector<8x128xbf16>
    %20 = arith.extf %19 : vector<8x128xbf16> to vector<8x128xf32>
    %21 = arith.mulf %18, %20 : vector<8x128xf32>
    %cst_12 = arith.constant dense<0.000000e+00> : vector<128xf32>
    %22 = vector.multi_reduction <add>, %21, %cst_12 [0] : vector<8x128xf32> to vector<128xf32>
    %23 = vector.shape_cast %22 : vector<128xf32> to vector<1x128xf32>
    %24 = arith.addf %16, %23 : vector<1x128xf32>
    %c24 = arith.constant 24 : index
    %c0_13 = arith.constant 0 : index
    %25 = vector.load %arg1[%c24, %c0_13] : memref<32x128xbf16, #tpu.memory_space<vmem>>, vector<8x128xbf16>
    %26 = arith.extf %25 : vector<8x128xbf16> to vector<8x128xf32>
    %c24_14 = arith.constant 24 : index
    %c0_15 = arith.constant 0 : index
    %27 = vector.load %arg2[%c24_14, %c0_15] : memref<32x128xbf16, #tpu.memory_space<vmem>>, vector<8x128xbf16>
    %28 = arith.extf %27 : vector<8x128xbf16> to vector<8x128xf32>
    %29 = arith.mulf %26, %28 : vector<8x128xf32>
    %cst_16 = arith.constant dense<0.000000e+00> : vector<128xf32>
    %30 = vector.multi_reduction <add>, %29, %cst_16 [0] : vector<8x128xf32> to vector<128xf32>
    %31 = vector.shape_cast %30 : vector<128xf32> to vector<1x128xf32>
    %32 = arith.addf %24, %31 : vector<1x128xf32>
    %c0_17 = arith.constant 0 : index
    %c0_18 = arith.constant 0 : index
    %33 = vector.load %arg4[%c0_17, %c0_18] : memref<1x128xf32, #tpu.memory_space<vmem>>, vector<1x128xf32>
    tpu.vector_store %arg4[%c0_17, %c0_18], %32 {strides = array<i32>} : memref<1x128xf32, #tpu.memory_space<vmem>>, vector<1x128xf32>,
    return
  }
  func.func @transform_0(%arg0: i32) -> (i32, i32) {
    %c0_i32 = arith.constant 0 : i32
    %c0_i32_0 = arith.constant 0 : i32
    return %c0_i32, %arg0 : i32, i32
  }
  func.func @transform_1(%arg0: i32) -> (i32, i32) {
    %c0_i32 = arith.constant 0 : i32
    %c0_i32_0 = arith.constant 0 : i32
    return %c0_i32, %arg0 : i32, i32
  }
  func.func @transform_2(%arg0: i32) -> (i32, i32) {
    %c0_i32 = arith.constant 0 : i32
    %c0_i32_0 = arith.constant 0 : i32
    return %c0_i32, %arg0 : i32, i32
  }
  func.func @transform_3(%arg0: i32) -> (i32, i32) {
    %c0_i32 = arith.constant 0 : i32
    %c0_i32_0 = arith.constant 0 : i32
    return %c0_i32, %arg0 : i32, i32
  }
}

</mosaic_0001>

<llo_original>
// kernel: bias_svd_forward.2
$region0: #{bias_svd_forward.2}
  #allocation0 [shape = 'u32[]', space=smem, size = 0x4, offset = 0x4, fixed_abs, tag = 'smem constant byte address 0x4 - core index']
  #allocation1 [shape = 'u32[144,128]{1,0:T(1,128)}', space=vmem, size = 0x12000, scoped, tag = 'internal scratch']
  %s0 = inlined_call_operand.vmem [shape: bf16[8,32], index: 0, kind: input, shape index: {}]
  %s1 = inlined_call_operand.vmem [shape: bf16[8,32], index: 1, kind: input, shape index: {}]
  %s2 = inlined_call_operand.vmem [shape: pred[8], index: 2, kind: input, shape index: {}]
  %s3 = inlined_call_operand.vmem [shape: pred[8], index: 3, kind: input, shape index: {}]
  %s4 = inlined_call_operand.<no memory space> [shape: bf16[], index: 4, kind: input, shape index: {}]
  %s5 = inlined_call_operand.vmem [shape: f32[8], index: 5, kind: input, shape index: {}]
  %s6 = inlined_call_operand.vmem [shape: f32[8], index: 6, kind: input, shape index: {}]
  %s7 = inlined_call_operand.<no memory space> [shape: f32[], index: 7, kind: input, shape index: {}]
  %s8 = inlined_call_operand.<no memory space> [shape: f32[], index: 8, kind: input, shape index: {}]
  %s9 = inlined_call_operand.hbm [shape: f32[1,8], index: 9, kind: output, shape index: {}]
  %s10 = sld [smem:[#allocation0]]
  $region42: #{bias_svd_forward.2} parent=0
    _
  %s12 = ssub.s32 1, %s10
  %s13 = scalar_select 0, %s12, %s10
  %v14 = vstv %s4
  %v15 = vunpack.i.l.bf16 %v14
  %v17 = vunpack.i.h.bf16 %v14
  %v19 = vstv %s4
  %v20 = vunpack.i.l.bf16 %v19
  %v22 = vunpack.i.h.bf16 %v19
  %v24 = vstv %s7
  %v25 = vstv %s8
  $region1: #{bias_svd_forward.2} parent=0
    #allocation2 [shape = 'u8[512]{0}', space=vmem, size = 0x400, scoped, tag = 'output window, operand 0, single buffered']
    #allocation3 [shape = 's32[1]{0}', space=sflag, size = 0x4, scoped, tag = 'scoped memory for bias_svd_forward.2']
    #allocation4 [shape = 'u8[8192]{0}', space=vmem, size = 0x2000, dematerialized = true, scoped, tag = 'FusionAdapter Buffer %fusion.2 = bf16[32,8]{1,0:T(8,128)(2,1)} fusion(%param_1.56, %param_3.11, %param_4.5), kind=kLoop, calls=%fused_computation.6.clone, metadata={op_name="jit(bias_svd_forward)/jit(_take)/select_n" stack_frame_id=9}']
    #allocation5 [shape = 'u8[8192]{0}', space=vmem, size = 0x2000, dematerialized = true, scoped, tag = 'FusionAdapter Buffer %fusion.1 = bf16[32,8]{1,0:T(8,128)(2,1)} fusion(%param_0.45, %param_2.35, %param_4.5), kind=kLoop, calls=%fused_computation.5.clone, metadata={op_name="jit(bias_svd_forward)/jit(_take)/select_n" stack_frame_id=11}']
    #allocation6 [shape = 'u8[512]{0}', space=vmem, size = 0x400, dematerialized = true, scoped, tag = 'FusionAdapter Buffer %fusion.8 = f32[1,8]{1,0:T(1,128)} fusion(%param_2.35, %param_5.8, %param_3.11, %param_6.4, %param_7.4, %param_8.3), kind=kLoop, calls=%fused_computation.18.clone, metadata={op_name="jit(bias_svd_forward)/add" stack_frame_id=16}']
    %26 = vsyncpa [#allocation3], 0
    // Predicated region
    $region2: #{bias_svd_forward.2} parent=1 // pred_check
      _
    $region3: #{bias_svd_forward.2} parent=1 // pred_check_branch
      %28 = sbr.rel (0) target = $region5
    $region4: #{bias_svd_forward.2} parent=1 // pred_region
      _
    $region5: #{bias_svd_forward.2} parent=1 // pred_fallthru
      _
    // Predicated region
    $region6: #{bias_svd_forward.2} parent=1 // pred_check
      _
    $region7: #{bias_svd_forward.2} parent=1 // pred_check_branch
      %30 = sbr.rel (0) target = $region9
    $region8: #{bias_svd_forward.2} parent=1 // pred_region
      _
    $region9: #{bias_svd_forward.2} parent=1 // pred_fallthru
      _
    // Predicated region
    $region10: #{bias_svd_forward.2} parent=1 // pred_check
      _
    $region11: #{bias_svd_forward.2} parent=1 // pred_check_branch
      %32 = sbr.rel (0) target = $region13
    $region12: #{bias_svd_forward.2} parent=1 // pred_region
      _
    $region13: #{bias_svd_forward.2} parent=1 // pred_fallthru
      _
    // Predicated region
    $region14: #{bias_svd_forward.2} parent=1 // pred_check
      _
    $region15: #{bias_svd_forward.2} parent=1 // pred_check_branch
      %34 = sbr.rel (0) target = $region17
    $region16: #{bias_svd_forward.2} parent=1 // pred_region
      _
    $region17: #{bias_svd_forward.2} parent=1 // pred_fallthru
      _
    // Predicated region
    $region18: #{bias_svd_forward.2} parent=1 // pred_check
      _
    $region19: #{bias_svd_forward.2} parent=1 // pred_check_branch
      %36 = sbr.rel (0) target = $region21
    $region20: #{bias_svd_forward.2} parent=1 // pred_region
      _
    $region21: #{bias_svd_forward.2} parent=1 // pred_fallthru
      _
    // Predicated region
    $region22: #{bias_svd_forward.2} parent=1 // pred_check
      _
    $region23: #{bias_svd_forward.2} parent=1 // pred_check_branch
      %38 = sbr.rel (0) target = $region25
    $region24: #{bias_svd_forward.2} parent=1 // pred_region
      _
    $region25: #{bias_svd_forward.2} parent=1 // pred_fallthru
      _
    // Predicated region
    $region26: #{bias_svd_forward.2} parent=1 // pred_check
      _
    $region27: #{bias_svd_forward.2} parent=1 // pred_check_branch
      %40 = sbr.rel (0) target = $region29
    $region28: #{bias_svd_forward.2} parent=1 // pred_region
      _
    $region29: #{bias_svd_forward.2} parent=1 // pred_fallthru
      _
    // Predicated region
    $region30: #{bias_svd_forward.2} parent=1 // pred_check
      _
    $region31: #{bias_svd_forward.2} parent=1 // pred_check_branch
      %42 = sbr.rel (0) target = $region33
    $region32: #{bias_svd_forward.2} parent=1 // pred_region
      _
    $region33: #{bias_svd_forward.2} parent=1 // pred_fallthru
      _
    %v43 = vld [vmem:[%s1] sm:$0xf]
    %v44 = vunpack.c.l.bf16 %v43
    %v45 = vunpack.c.h.bf16 %v43
    %v46 = vld [vmem:[%s3] ss:$0 sm:$0xff]
    %v48 = vshra.s32 %v46, 0
    %v49 = vand.u32 %v48, 255
    %50 = xla_tuple %v49, %v44, %v15
    %51 = xla_tuple %50
    %vm52 = vcmp.ne.s32.totalorder %v49, 0
    %v53 = vsel %vm52, %v44, %v15
    %54 = xla_tuple %v53
    %v55 = vpack.c.bf16 0.0, %v53
    %s57 = ssub.s32 16, 1
    %58 = vst [vmem:[#allocation4] sm:%s57] %v55
    %s59 = scalar_lea.vmem %s1, 4
    %v60 = vld [vmem:[%s59] sm:$0xf]
    %v61 = vunpack.c.l.bf16 %v60
    %v62 = vunpack.c.h.bf16 %v60
    %63 = xla_tuple %v49, %v61, %v15
    %64 = xla_tuple %63
    %vm65 = vcmp.ne.s32.totalorder %v49, 0
    %v66 = vsel %vm65, %v61, %v15
    %67 = xla_tuple %v66
    %s68 = scalar_lea.vmem [#allocation4], 4
    %v69 = vpack.c.bf16 0.0, %v66
    %s71 = ssub.s32 16, 1
    %72 = vst [vmem:[%s68] sm:%s71] %v69
    %s73 = scalar_lea.vmem %s1, 8
    %v74 = vld [vmem:[%s73] sm:$0xf]
    %v75 = vunpack.c.l.bf16 %v74
    %v76 = vunpack.c.h.bf16 %v74
    %77 = xla_tuple %v49, %v75, %v15
    %78 = xla_tuple %77
    %vm79 = vcmp.ne.s32.totalorder %v49, 0
    %v80 = vsel %vm79, %v75, %v15
    %81 = xla_tuple %v80
    %s82 = scalar_lea.vmem [#allocation4], 8
    %v83 = vpack.c.bf16 0.0, %v80
    %s85 = ssub.s32 16, 1
    %86 = vst [vmem:[%s82] sm:%s85] %v83
    %s87 = scalar_lea.vmem %s1, 12
    %v88 = vld [vmem:[%s87] sm:$0xf]
    %v89 = vunpack.c.l.bf16 %v88
    %v90 = vunpack.c.h.bf16 %v88
    %91 = xla_tuple %v49, %v89, %v15
    %92 = xla_tuple %91
    %vm93 = vcmp.ne.s32.totalorder %v49, 0
    %v94 = vsel %vm93, %v89, %v15
    %95 = xla_tuple %v94
    %s96 = scalar_lea.vmem [#allocation4], 12
    %v97 = vpack.c.bf16 0.0, %v94
    %s99 = ssub.s32 16, 1
    %100 = vst [vmem:[%s96] sm:%s99] %v97
    %v101 = vld [vmem:[%s0] sm:$0xf]
    %v102 = vunpack.c.l.bf16 %v101
    %v103 = vunpack.c.h.bf16 %v101
    %v104 = vld [vmem:[%s2] ss:$0 sm:$0xff]
    %v106 = vshra.s32 %v104, 0
    %v107 = vand.u32 %v106, 255
    %108 = xla_tuple %v107, %v102, %v20
    %109 = xla_tuple %108
    %vm110 = vcmp.ne.s32.totalorder %v107, 0
    %v111 = vsel %vm110, %v102, %v20
    %112 = xla_tuple %v111
    %v113 = vpack.c.bf16 0.0, %v111
    %s115 = ssub.s32 16, 1
    %116 = vst [vmem:[#allocation5] sm:%s115] %v113
    %s117 = scalar_lea.vmem %s0, 4
    %v118 = vld [vmem:[%s117] sm:$0xf]
    %v119 = vunpack.c.l.bf16 %v118
    %v120 = vunpack.c.h.bf16 %v118
    %121 = xla_tuple %v107, %v119, %v20
    %122 = xla_tuple %121
    %vm123 = vcmp.ne.s32.totalorder %v107, 0
    %v124 = vsel %vm123, %v119, %v20
    %125 = xla_tuple %v124
    %s126 = scalar_lea.vmem [#allocation5], 4
    %v127 = vpack.c.bf16 0.0, %v124
    %s129 = ssub.s32 16, 1
    %130 = vst [vmem:[%s126] sm:%s129] %v127
    %s131 = scalar_lea.vmem %s0, 8
    %v132 = vld [vmem:[%s131] sm:$0xf]
    %v133 = vunpack.c.l.bf16 %v132
    %v134 = vunpack.c.h.bf16 %v132
    %135 = xla_tuple %v107, %v133, %v20
    %136 = xla_tuple %135
    %vm137 = vcmp.ne.s32.totalorder %v107, 0
    %v138 = vsel %vm137, %v133, %v20
    %139 = xla_tuple %v138
    %s140 = scalar_lea.vmem [#allocation5], 8
    %v141 = vpack.c.bf16 0.0, %v138
    %s143 = ssub.s32 16, 1
    %144 = vst [vmem:[%s140] sm:%s143] %v141
    %s145 = scalar_lea.vmem %s0, 12
    %v146 = vld [vmem:[%s145] sm:$0xf]
    %v147 = vunpack.c.l.bf16 %v146
    %v148 = vunpack.c.h.bf16 %v146
    %149 = xla_tuple %v107, %v147, %v20
    %150 = xla_tuple %149
    %vm151 = vcmp.ne.s32.totalorder %v107, 0
    %v152 = vsel %vm151, %v147, %v20
    %153 = xla_tuple %v152
    %s154 = scalar_lea.vmem [#allocation5], 12
    %v155 = vpack.c.bf16 0.0, %v152
    %s157 = ssub.s32 16, 1
    %158 = vst [vmem:[%s154] sm:%s157] %v155
    %v159 = vld [vmem:[%s2] ss:$0 sm:$0xf]
    %v160 = vunpack.c.0.s8 %v159
    %v161 = vunpack.c.1.s8 %v159
    %v162 = vunpack.c.2.s8 %v159
    %v163 = vunpack.c.3.s8 %v159
    %v164 = vld [vmem:[%s5] sm:$0x1]
    %v165 = vld [vmem:[%s3] ss:$0 sm:$0xf]
    %v166 = vunpack.c.0.s8 %v165
    %v167 = vunpack.c.1.s8 %v165
    %v168 = vunpack.c.2.s8 %v165
    %v169 = vunpack.c.3.s8 %v165
    %v170 = vld [vmem:[%s6] sm:$0x1]
    %171 = xla_tuple %v166, %v170, %v25
    %172 = xla_tuple %171
    %vm173 = vcmp.ne.s32.totalorder %v166, 0
    %v174 = vsel %vm173, %v170, %v25
    %175 = xla_tuple %v174
    %176 = xla_tuple %v160, %v164, %v25
    %177 = xla_tuple %176
    %vm178 = vcmp.ne.s32.totalorder %v160, 0
    %v179 = vsel %vm178, %v164, %v25
    %180 = xla_tuple %v179
    %181 = xla_tuple %v174, %v179
    %182 = xla_tuple %181
    %v183 = vadd.f32 %v174, %v179
    %184 = xla_tuple %v183
    %185 = xla_tuple %v183, %v24
    %186 = xla_tuple %185
    %v187 = vadd.f32 %v183, %v24
    %188 = xla_tuple %v187
    %s190 = ssub.s32 2, 1
    %191 = vst [vmem:[#allocation6] sm:%s190] %v187
    %v192 = vld [vmem:[#allocation6] sm:$0x1]
    %v193 = vld [vmem:[#allocation4] sm:$0xf]
    %v194 = vunpack.c.l.bf16 %v193
    %v195 = vld [vmem:[#allocation5] sm:$0xf]
    %v196 = vunpack.c.l.bf16 %v195
    %v197 = vmul.f32 %v194, %v196
    %v198 = vrot.slane %v197, 4
    %v199 = vadd.f32 %v197, %v198
    %v200 = vrot.slane %v199, 2
    %v201 = vadd.f32 %v199, %v200
    %v202 = vrot.slane %v201, 1
    %v203 = vadd.f32 %v201, %v202
    %v204 = vadd.f32 %v192, %v203
    %v205 = vld [vmem:[#allocation4 + $0x4] sm:$0xf]
    %v206 = vunpack.c.l.bf16 %v205
    %v207 = vld [vmem:[#allocation5 + $0x4] sm:$0xf]
    %v208 = vunpack.c.l.bf16 %v207
    %v209 = vmul.f32 %v206, %v208
    %v210 = vrot.slane %v209, 4
    %v211 = vadd.f32 %v209, %v210
    %v212 = vrot.slane %v211, 2
    %v213 = vadd.f32 %v211, %v212
    %v214 = vrot.slane %v213, 1
    %v215 = vadd.f32 %v213, %v214
    %v216 = vadd.f32 %v204, %v215
    %v217 = vld [vmem:[#allocation4 + $0x8] sm:$0xf]
    %v218 = vunpack.c.l.bf16 %v217
    %v219 = vld [vmem:[#allocation5 + $0x8] sm:$0xf]
    %v220 = vunpack.c.l.bf16 %v219
    %v221 = vmul.f32 %v218, %v220
    %v222 = vrot.slane %v221, 4
    %v223 = vadd.f32 %v221, %v222
    %v224 = vrot.slane %v223, 2
    %v225 = vadd.f32 %v223, %v224
    %v226 = vrot.slane %v225, 1
    %v227 = vadd.f32 %v225, %v226
    %v228 = vadd.f32 %v216, %v227
    %v229 = vld [vmem:[#allocation4 + $0xc] sm:$0xf]
    %v230 = vunpack.c.l.bf16 %v229
    %v231 = vld [vmem:[#allocation5 + $0xc] sm:$0xf]
    %v232 = vunpack.c.l.bf16 %v231
    %v233 = vmul.f32 %v230, %v232
    %v234 = vrot.slane %v233, 4
    %v235 = vadd.f32 %v233, %v234
    %v236 = vrot.slane %v235, 2
    %v237 = vadd.f32 %v235, %v236
    %v238 = vrot.slane %v237, 1
    %v239 = vadd.f32 %v237, %v238
    %v240 = vadd.f32 %v228, %v239
    %241 = vst [vmem:[#allocation2] sm:$0x1] %v240
    // Predicated region
    $region34: #{bias_svd_forward.2} parent=1 // pred_check
      _
    $region35: #{bias_svd_forward.2} parent=1 // pred_check_branch
      %243 = sbr.rel (0) target = $region37
    $region36: #{bias_svd_forward.2} parent=1 // pred_region
      %s245 = ssub.s32 16, 16
      %246 = vsyncadd [#allocation3], %s245
      %s248 = sshll.u32 [#allocation2], 4
      %s249 = int_to_ptr.vmem [resolvable:$true] %s248
      %251 = dma.vmem_to_hbm [thread:$0]  %s249, 16, %s9, [#allocation3]
    $region37: #{bias_svd_forward.2} parent=1 // pred_fallthru
      _
    // Predicated region
    $region38: #{bias_svd_forward.2} parent=1 // pred_check
      _
    $region39: #{bias_svd_forward.2} parent=1 // pred_check_branch
      %253 = sbr.rel (0) target = $region41
    $region40: #{bias_svd_forward.2} parent=1 // pred_region
      %254 = dma.done [#allocation3], 16
    $region41: #{bias_svd_forward.2} parent=1 // pred_fallthru
      _
    %255 = vsyncpa [#allocation3], 1

</llo_original>
